<compile_context>
chip_gen: v5e
topology: v5e:2x2
jax: 0.10.0
libtpu: 0.0.40
codegen_flags: <defaults>
</compile_context>

<pallas_src>
import functools

import jax
import jax.numpy as jnp
from jax.experimental import pallas as pl
from jax.experimental.pallas import tpu as pltpu

# a (TB, 1) int32 block pads to (TB, 128) lanes in VMEM
_TARGETS_ROW_PAD_BYTES = 128 * 4


def _cw_loss_kernel(logits_ref, targets_ref, out_ref, *, margin, batch, mask_rows):
    logits = logits_ref[...]                                  # (TB, C) native dtype
    # Native bf16/f32 compute is exact for this kernel (max + single-nonzero
    # sum); only oddball dtypes (fp16/fp8) are upcast since the TPU VPU has no
    # native support for them.
    if logits.dtype not in (jnp.dtype(jnp.bfloat16), jnp.dtype(jnp.float32)):
        logits = logits.astype(jnp.float32)
    tgt = targets_ref[...]                                    # (TB, 1) int32
    tb, c = logits.shape

    # boolean target mask via 2-D iota compare (TPU needs >= 2-D iota)
    class_ids = jax.lax.broadcasted_iota(jnp.int32, (tb, c), 1)
    is_target = class_ids == tgt                              # (TB, C) bool

    zero = jnp.asarray(0.0, logits.dtype)
    neg_big = jnp.asarray(-1000.0, logits.dtype)              # exactly representable in bf16

    # self_loss  = logit at the target class (exactly one nonzero per row -> exact sum)
    self_loss = jnp.sum(jnp.where(is_target, logits, zero),
                        axis=1, keepdims=True).astype(jnp.float32)
    # other_loss = row max with the target slot forced to -1000
    #              (bit-exact match of (1 - onehot)*logits - onehot*1000)
    other_loss = jnp.max(jnp.where(is_target, neg_big, logits),
                         axis=1, keepdims=True).astype(jnp.float32)

    per_sample = jnp.maximum(self_loss - other_loss + margin, 0.0)   # (TB, 1) f32

    if mask_rows:
        # only traced when B % TB != 0; select (not multiply) so garbage in the
        # padded rows of the last partial tile cannot reach the sum.
        row_ids = (pl.program_id(0) * tb
                   + jax.lax.broadcasted_iota(jnp.int32, (tb, 1), 0))
        per_sample = jnp.where(row_ids < batch, per_sample, 0.0)

    tile_sum = -jnp.sum(per_sample, keepdims=True)                    # (1, 1)
    # lane-dense, unmasked (8, 128) store of this tile's partial
    out_ref[...] = jnp.broadcast_to(tile_sum, out_ref.shape).astype(out_ref.dtype)


def _choose_batch_tile(b, c, itemsize, batch_tile=None, tile_byte_cap=8 << 20):
    """Rows per grid step, sized purely by bytes/step; >= 2 tiles when b >= 16."""
    if batch_tile is not None:
        if batch_tile >= b:
            return b
        assert batch_tile % 8 == 0, "batch_tile must be a multiple of 8"
        return batch_tile

    if b < 16:
        return b                       # single full-array block (always legal)

    per_row_bytes = c * itemsize + _TARGETS_ROW_PAD_BYTES
    cap_rows = max(8, (tile_byte_cap // per_row_bytes) // 8 * 8)

    # guarantee at least 2 tiles so megacore (v7x) can shard the parallel axis
    half_rows = ((-(-b // 2)) + 7) // 8 * 8      # round_up(ceil(b/2), 8) < b for b >= 16
    return max(8, min(cap_rows, half_rows))


def cw_loss(logits, targets, *, num_classes, margin=50.0, reduce=True,
            batch_tile=None, min_pallas_elements=65536, tile_byte_cap=8 << 20):
    """Pallas implementation of CWLoss.forward.

    logits : (B, num_classes) float array (any float dtype; bf16/f32 computed natively)
    targets: (B,) integer class indices
    returns: scalar float32 loss
    """
    assert logits.ndim == 2 and logits.shape[1] == num_classes
    b, c = logits.shape

    # tiny problems: kernel-launch + per-grid-step overhead dominates; fused XLA wins
    if b * c < min_pallas_elements:
        return cw_loss_ref(logits, targets, num_classes=num_classes,
                           margin=margin, reduce=reduce)

    itemsize = jnp.dtype(logits.dtype).itemsize
    tb = _choose_batch_tile(b, c, itemsize, batch_tile, tile_byte_cap)
    num_tiles = pl.cdiv(b, tb)

    # double-buffered footprint: logits tile + lane-padded targets block + out blocks
    per_row_bytes = c * itemsize + _TARGETS_ROW_PAD_BYTES
    footprint = 2 * tb * per_row_bytes + 2 * 8 * 128 * 4
    if footprint > (96 << 20):
        # pathologically wide class axis: even an 8-row tile blows VMEM; bail out
        return cw_loss_ref(logits, targets, num_classes=num_classes,
                           margin=margin, reduce=reduce)
    # explicit VMEM budget: >= 32 MiB (covers v5e's 16 MiB default being too small),
    # <= 48 MiB (headroom under v7x's 64 MiB/TC physical VMEM)
    vmem_limit = int(min(48 << 20, max(32 << 20, footprint + (4 << 20))))

    targets2d = targets.astype(jnp.int32).reshape(b, 1)
    mask_rows = (b % tb) != 0

    kernel = functools.partial(_cw_loss_kernel, margin=float(margin), batch=b,
                               mask_rows=mask_rows)

    cost = pl.CostEstimate(
        flops=6 * b * c,
        transcendentals=0,
        bytes_accessed=b * c * itemsize + b * 4 + num_tiles * 8 * 128 * 4,
    )

    partials = pl.pallas_call(
        kernel,
        out_shape=jax.ShapeDtypeStruct((num_tiles * 8, 128), jnp.float32),
        grid=(num_tiles,),
        in_specs=[
            pl.BlockSpec((tb, c), lambda i: (i, 0)),
            pl.BlockSpec((tb, 1), lambda i: (i, 0)),
        ],
        out_specs=pl.BlockSpec((8, 128), lambda i: (i, 0)),
        compiler_params=pltpu.CompilerParams(
            dimension_semantics=("parallel",),
            vmem_limit_bytes=vmem_limit,
        ),
        cost_estimate=cost,
    )(logits, targets2d)

    # each tile broadcast its scalar partial into one (8, 128) block; take one
    # representative element per block and finish the tiny reduction here.
    # NOTE: this stride is coupled to the (8, 128) out block + lambda i: (i, 0) map.
    total = jnp.sum(partials[0::8, 0])
    if reduce:
        total = total / b              # mean over the FULL batch, not the tile size
    return total


def cw_loss_ref(logits, targets, *, num_classes, margin=50.0, reduce=True):
    """Pure-JAX reference mirroring the PyTorch module."""
    logits = logits.astype(jnp.float32)
    onehot = jax.nn.one_hot(targets, num_classes, dtype=jnp.float32)
    self_loss = jnp.sum(onehot * logits, axis=1)
    other_loss = jnp.max((1.0 - onehot) * logits - onehot * 1000.0, axis=1)
    loss = -jnp.sum(jnp.maximum(self_loss - other_loss + margin, 0.0))
    if reduce:
        loss = loss / onehot.shape[0]
    return loss


if __name__ == "__main__":
    key = jax.random.PRNGKey(0)
    k_logits, k_targets = jax.random.split(key)

    batch = 40            # not a multiple of the batch tile -> exercises row masking
    num_classes = 24

    logits = jax.random.normal(k_logits, (batch, num_classes), dtype=jnp.float32) * 5.0
    targets = jax.random.randint(k_targets, (batch,), 0, num_classes, dtype=jnp.int32)
    ref = cw_loss_ref(logits, targets, num_classes=num_classes, margin=50.0, reduce=True)

    # f32 path, explicit batch_tile=16 -> 3 tiles (last one partial).
    # min_pallas_elements=0 forces the Pallas path at this small demo size.
    out = cw_loss(logits, targets, num_classes=num_classes, margin=50.0,
                  reduce=True, batch_tile=16, min_pallas_elements=0)
    out = jax.block_until_ready(out)
    assert jnp.allclose(out, ref, rtol=1e-5, atol=1e-5), (out, ref)

    # f32 path, automatic tile chooser (>= 2 tiles, byte-capped, partial last tile)
    out_auto = cw_loss(logits, targets, num_classes=num_classes, margin=50.0,
                       reduce=True, batch_tile=None, min_pallas_elements=0)
    out_auto = jax.block_until_ready(out_auto)
    assert jnp.allclose(out_auto, ref, rtol=1e-5, atol=1e-5), (out_auto, ref)

    # native-dtype path: bf16 logits are DMA'd as bf16 and computed in bf16
    logits_bf16 = logits.astype(jnp.bfloat16)
    ref_bf16 = cw_loss_ref(logits_bf16, targets, num_classes=num_classes,
                           margin=50.0, reduce=True)
    out_bf16 = cw_loss(logits_bf16, targets, num_classes=num_classes, margin=50.0,
                       reduce=True, batch_tile=16, min_pallas_elements=0)
    out_bf16 = jax.block_until_ready(out_bf16)
    assert jnp.allclose(out_bf16, ref_bf16, rtol=1e-4, atol=1e-4), (out_bf16, ref_bf16)

    print("KERNEL_OK")
</pallas_src>

<mosaic_0001>
module attributes {stable_mosaic.version = 11 : i64} {
  func.func @_cw_loss_kernel(%arg0: i32, %arg1: memref<16x24xf32, #tpu.memory_space<vmem>>, %arg2: memref<16x1xi32, #tpu.memory_space<vmem>>, %arg3: memref<8x128xf32, #tpu.memory_space<vmem>>) attributes {dimension_semantics = [#tpu.dimension_semantics<parallel>], iteration_bounds = array<i64: 3>, scalar_prefetch = 0 : i64, scratch_operands = 0 : i64, tpu.core_type = #tpu.core_type<tc>, window_params = [{transform_indices = @transform_0, window_bounds = array<i64: 16, 24>}, {transform_indices = @transform_1, window_bounds = array<i64: 16, 1>}, {transform_indices = @transform_2, window_bounds = array<i64: 8, 128>}]} {
    %c0 = arith.constant 0 : index
    %c0_0 = arith.constant 0 : index
    %0 = vector.load %arg1[%c0, %c0_0] : memref<16x24xf32, #tpu.memory_space<vmem>>, vector<16x24xf32>
    %c0_1 = arith.constant 0 : index
    %c0_2 = arith.constant 0 : index
    %1 = vector.load %arg2[%c0_1, %c0_2] : memref<16x1xi32, #tpu.memory_space<vmem>>, vector<16x1xi32>
    %2 = tpu.iota {dimensions = array<i32: 1>} : vector<16x24xi32>
    %3 = vector.broadcast %1 : vector<16x1xi32> to vector<16x24xi32>
    %4 = arith.cmpi eq, %2, %3 : vector<16x24xi32>
    %cst = arith.constant 0.000000e+00 : f32
    %5 = vector.broadcast %cst : f32 to vector<16x24xf32>
    %6 = arith.select %4, %0, %5 : vector<16x24xi1>, vector<16x24xf32>
    %cst_3 = arith.constant dense<0.000000e+00> : vector<16xf32>
    %7 = vector.multi_reduction <add>, %6, %cst_3 [1] : vector<16x24xf32> to vector<16xf32>
    %8 = vector.shape_cast %7 : vector<16xf32> to vector<16x1xf32>
    %cst_4 = arith.constant -1.000000e+03 : f32
    %9 = vector.broadcast %cst_4 : f32 to vector<16x24xf32>
    %10 = arith.select %4, %9, %0 : vector<16x24xi1>, vector<16x24xf32>
    %cst_5 = arith.constant dense<0xFF800000> : vector<16xf32>
    %11 = vector.multi_reduction <maximumf>, %10, %cst_5 [1] : vector<16x24xf32> to vector<16xf32>
    %12 = vector.shape_cast %11 : vector<16xf32> to vector<16x1xf32>
    %13 = arith.subf %8, %12 : vector<16x1xf32>
    %cst_6 = arith.constant 5.000000e+01 : f32
    %14 = vector.broadcast %cst_6 : f32 to vector<16x1xf32>
    %15 = arith.addf %13, %14 : vector<16x1xf32>
    %cst_7 = arith.constant 0.000000e+00 : f32
    %16 = vector.broadcast %cst_7 : f32 to vector<16x1xf32>
    %17 = arith.maximumf %15, %16 : vector<16x1xf32>
    %c16_i32 = arith.constant 16 : i32
    %18 = arith.muli %arg0, %c16_i32 : i32
    %19 = tpu.iota {dimensions = array<i32: 0>} : vector<16x1xi32>
    %20 = vector.broadcast %18 : i32 to vector<16x1xi32>
    %21 = arith.addi %20, %19 : vector<16x1xi32>
    %c40_i32 = arith.constant 40 : i32
    %22 = vector.broadcast %c40_i32 : i32 to vector<16x1xi32>
    %23 = arith.cmpi slt, %21, %22 : vector<16x1xi32>
    %cst_8 = arith.constant 0.000000e+00 : f32
    %24 = vector.broadcast %cst_8 : f32 to vector<16x1xf32>
    %25 = arith.select %23, %17, %24 : vector<16x1xi1>, vector<16x1xf32>
    %26 = vector.shape_cast %25 : vector<16x1xf32> to vector<1x16x1xf32>
    %cst_9 = arith.constant dense<0.000000e+00> : vector<1xf32>
    %27 = vector.multi_reduction <add>, %26, %cst_9 [1, 2] : vector<1x16x1xf32> to vector<1xf32>
    %28 = vector.shape_cast %27 : vector<1xf32> to vector<1x1x1xf32>
    %29 = vector.extract %28[0, 0, 0] : f32 from vector<1x1x1xf32>
    %30 = vector.broadcast %29 : f32 to vector<1x1xf32>
    %cst_10 = arith.constant 0.000000e+00 : f32
    %31 = vector.broadcast %cst_10 : f32 to vector<1x1xf32>
    %32 = arith.subf %31, %30 : vector<1x1xf32>
    %33 = vector.shape_cast %32 : vector<1x1xf32> to vector<1x1xf32>
    %34 = vector.broadcast %33 : vector<1x1xf32> to vector<8x128xf32>
    %c0_11 = arith.constant 0 : index
    %c0_12 = arith.constant 0 : index
    %35 = vector.load %arg3[%c0_11, %c0_12] : memref<8x128xf32, #tpu.memory_space<vmem>>, vector<8x128xf32>
    tpu.vector_store %arg3[%c0_11, %c0_12], %34 {strides = array<i32>} : memref<8x128xf32, #tpu.memory_space<vmem>>, vector<8x128xf32>,
    return
  }
  func.func @transform_0(%arg0: i32) -> (i32, i32) {
    %c0_i32 = arith.constant 0 : i32
    %c0_i32_0 = arith.constant 0 : i32
    return %arg0, %c0_i32 : i32, i32
  }
  func.func @transform_1(%arg0: i32) -> (i32, i32) {
    %c0_i32 = arith.constant 0 : i32
    %c0_i32_0 = arith.constant 0 : i32
    return %arg0, %c0_i32 : i32, i32
  }
  func.func @transform_2(%arg0: i32) -> (i32, i32) {
    %c0_i32 = arith.constant 0 : i32
    %c0_i32_0 = arith.constant 0 : i32
    return %arg0, %c0_i32 : i32, i32
  }
}

</mosaic_0001>

<llo_original>
// kernel: tpu_custom_call.1
$region0: #{tpu_custom_call.1}
  #allocation0 [shape = 'u32[]', space=smem, size = 0x4, offset = 0x4, fixed_abs, tag = 'smem constant byte address 0x4 - core index']
  #allocation1 [shape = 'u32[72,128]{1,0:T(1,128)}', space=vmem, size = 0x9000, scoped, tag = 'internal scratch']
  %s0 = inlined_call_operand.vmem [shape: f32[40,24], index: 0, kind: input, shape index: {}]
  %s1 = inlined_call_operand.vmem [shape: s32[40,1], index: 1, kind: input, shape index: {}]
  %s2 = inlined_call_operand.hbm [shape: f32[24,128], index: 2, kind: output, shape index: {}]
  %s3 = sld [smem:[#allocation0]]
  $region41: #{tpu_custom_call.1} parent=0
    _
  %s5 = ssub.s32 1, %s3
  %s6 = scalar_select 0, %s5, %s3
  $region1: #{tpu_custom_call.1} parent=0
    #allocation2 [shape = 'u8[8192]{0}', space=vmem, size = 0x2000, scoped, tag = 'output window, operand 0']
    #allocation3 [shape = 's32[2]{0}', space=sflag, size = 0x8, scoped, tag = 'scoped memory for tpu_custom_call.1']
    %7 = vsyncpa [#allocation3], 0
    %s8 = scalar_lea.sflag [#allocation3], 1
    %9 = vsyncpa %s8, 0
    loop: start=0, step=1, limit=5
    $region2: #{tpu_custom_call.1} parent=1 // loop_pre_header
      _
    $region3: #{tpu_custom_call.1} parent=1 // loop_header
      %s11 = sphi 0, %s15
      %p12 = scmp.ge.s32.totalorder %s11, 5
      %s21 = sphi 0, %s23
      %s24 = sphi 0, %s21
      %s25 = sphi 0, %s24
      %s41 = sphi 0, %s25
      %s47 = sphi 0, %s49
      %s50 = sphi 0, %s47
      %s51 = sphi 0, %s50
      %s67 = sphi 0, %s51
      %s73 = sphi 0, %s75
      %s76 = sphi 0, %s73
      %s77 = sphi 0, %s76
      %s93 = sphi 0, %s77
    $region4: #{tpu_custom_call.1} parent=1 // loop_header_branch
      %14 = sbr.rel (%p12) target = $region8
    $region5: #{tpu_custom_call.1} parent=1 // loop_body
      %s16 = ssub.s32 %s11, 1
      %s17 = ssub.s32 %s11, 2
      %s18 = sadd.s32 %s11, 1
      %s19 = ssub.s32 %s11, %s18
      %p20 = scmp.eq.s32.totalorder %s19, 0
      %s22 = sadd.s32 %s21, 1
      %s23 = scalar_select %p20, %s21, %s22
      %p26 = pneg %p20
      %p27 = scmp.eq.s32.totalorder %s11, 2
      %p28 = por %p26, %p27
      %p29 = scmp.ne.s32.totalorder %s21, %s24
      %p30 = scmp.eq.s32.totalorder %s11, 0
      %p31 = por %p29, %p30
      %p32 = scmp.ne.s32.totalorder %s21, %s24
      %p33 = scmp.eq.s32.totalorder %s16, 2
      %p34 = por %p32, %p33
      %p35 = scmp.ne.s32.totalorder %s24, %s25
      %p36 = scmp.eq.s32.totalorder %s16, 0
      %p37 = por %p35, %p36
      %p38 = scmp.ne.s32.totalorder %s24, %s25
      %p39 = scmp.eq.s32.totalorder %s17, 2
      %p40 = por %p38, %p39
      %p42 = scmp.ne.s32.totalorder %s25, %s41
      %p43 = scmp.eq.s32.totalorder %s17, 0
      %p44 = por %p42, %p43
      %s45 = ssub.s32 %s11, %s18
      %p46 = scmp.eq.s32.totalorder %s45, 0
      %s48 = sadd.s32 %s47, 1
      %s49 = scalar_select %p46, %s47, %s48
      %p52 = pneg %p46
      %p53 = scmp.eq.s32.totalorder %s11, 2
      %p54 = por %p52, %p53
      %p55 = scmp.ne.s32.totalorder %s47, %s50
      %p56 = scmp.eq.s32.totalorder %s11, 0
      %p57 = por %p55, %p56
      %p58 = scmp.ne.s32.totalorder %s47, %s50
      %p59 = scmp.eq.s32.totalorder %s16, 2
      %p60 = por %p58, %p59
      %p61 = scmp.ne.s32.totalorder %s50, %s51
      %p62 = scmp.eq.s32.totalorder %s16, 0
      %p63 = por %p61, %p62
      %p64 = scmp.ne.s32.totalorder %s50, %s51
      %p65 = scmp.eq.s32.totalorder %s17, 2
      %p66 = por %p64, %p65
      %p68 = scmp.ne.s32.totalorder %s51, %s67
      %p69 = scmp.eq.s32.totalorder %s17, 0
      %p70 = por %p68, %p69
      %s71 = ssub.s32 %s11, %s18
      %p72 = scmp.eq.s32.totalorder %s71, 0
      %s74 = sadd.s32 %s73, 1
      %s75 = scalar_select %p72, %s73, %s74
      %p78 = pneg %p72
      %p79 = scmp.eq.s32.totalorder %s11, 2
      %p80 = por %p78, %p79
      %p81 = scmp.ne.s32.totalorder %s73, %s76
      %p82 = scmp.eq.s32.totalorder %s11, 0
      %p83 = por %p81, %p82
      %p84 = scmp.ne.s32.totalorder %s73, %s76
      %p85 = scmp.eq.s32.totalorder %s16, 2
      %p86 = por %p84, %p85
      %p87 = scmp.ne.s32.totalorder %s76, %s77
      %p88 = scmp.eq.s32.totalorder %s16, 0
      %p89 = por %p87, %p88
      %p90 = scmp.ne.s32.totalorder %s76, %s77
      %p91 = scmp.eq.s32.totalorder %s17, 2
      %p92 = por %p90, %p91
      %p94 = scmp.ne.s32.totalorder %s77, %s93
      %p95 = scmp.eq.s32.totalorder %s17, 0
      %p96 = por %p94, %p95
      %p97 = scmp.le.s32.totalorder 1, %s11
      %p98 = scmp.lt.s32.totalorder %s11, 4
      %p99 = pnand %p97, %p98
      %p100 = pneg %p99
      // Predicated region
      $region9: #{tpu_custom_call.1} parent=5 // pred_check
        _
      $region10: #{tpu_custom_call.1} parent=5 // pred_check_branch
        %102 = sbr.rel (%p99) target = $region12
      $region11: #{tpu_custom_call.1} parent=5 // pred_region
        %s103 = ssub.s32 %s11, 1
      $region12: #{tpu_custom_call.1} parent=5 // pred_fallthru
        _
      %p104 = scmp.lt.s32.totalorder %s11, 3
      // Predicated region
      $region13: #{tpu_custom_call.1} parent=5 // pred_check
        %p105 = pneg %p104
      $region14: #{tpu_custom_call.1} parent=5 // pred_check_branch
        %107 = sbr.rel (%p105) target = $region16
      $region15: #{tpu_custom_call.1} parent=5 // pred_region
        // Predicated region
        $region17: #{tpu_custom_call.1} parent=15 // pred_check
          %p108 = pneg %p31
        $region18: #{tpu_custom_call.1} parent=15 // pred_check_branch
          %110 = sbr.rel (%p108) target = $region20
        $region19: #{tpu_custom_call.1} parent=15 // pred_region
          %s111 = smul.u32 2, %s11
          %s112 = ssub.s32 5, %s111
          %p113 = scmp.lt.s32.totalorder %s112, 2
          %s114 = scalar_select %p113, %s112, 2
          %s115 = smul.u32 8, %s114
          %p116 = scmp.lt.s32.totalorder %s111, 4
          %s117 = scalar_select %p116, %s111, 4
          %s118 = smul.addr %s117, 8
          %s119 = scalar_lea.vmem %s0, %s118
          %s120 = smul.u32 2, %s11
          %s121 = ssub.s32 5, %s120
          %p122 = scmp.lt.s32.totalorder %s121, 2
          %s123 = scalar_select %p122, %s121, 2
          %s124 = smul.u32 8, %s123
        $region20: #{tpu_custom_call.1} parent=15 // pred_fallthru
          _
        // Predicated region
        $region21: #{tpu_custom_call.1} parent=15 // pred_check
          %p125 = pneg %p57
        $region22: #{tpu_custom_call.1} parent=15 // pred_check_branch
          %127 = sbr.rel (%p125) target = $region24
        $region23: #{tpu_custom_call.1} parent=15 // pred_region
          %s128 = smul.u32 2, %s11
          %s129 = ssub.s32 5, %s128
          %p130 = scmp.lt.s32.totalorder %s129, 2
          %s131 = scalar_select %p130, %s129, 2
          %s132 = smul.u32 8, %s131
          %p133 = scmp.lt.s32.totalorder %s128, 4
          %s134 = scalar_select %p133, %s128, 4
          %s135 = smul.addr %s134, 8
          %s136 = scalar_lea.vmem %s1, %s135
          %s137 = smul.u32 2, %s11
          %s138 = ssub.s32 5, %s137
          %p139 = scmp.lt.s32.totalorder %s138, 2
          %s140 = scalar_select %p139, %s138, 2
          %s141 = smul.u32 8, %s140
        $region24: #{tpu_custom_call.1} parent=15 // pred_fallthru
          _
      $region16: #{tpu_custom_call.1} parent=5 // pred_fallthru
        _
      %p142 = scmp.le.s32.totalorder 1, %s11
      %p143 = scmp.lt.s32.totalorder %s11, 4
      %p144 = pnand %p142, %p143
      %p145 = pneg %p144
      // Predicated region
      $region25: #{tpu_custom_call.1} parent=5 // pred_check
        _
      $region26: #{tpu_custom_call.1} parent=5 // pred_check_branch
        %147 = sbr.rel (%p144) target = $region28
      $region27: #{tpu_custom_call.1} parent=5 // pred_region
        %s148 = ssub.s32 %s11, 1
        %s149 = smul.u32 2, %s16
        %s150 = ssub.s32 5, %s149
        %p151 = scmp.lt.s32.totalorder %s150, 2
        %s152 = scalar_select %p151, %s150, 2
        %s153 = smul.u32 8, %s152
        %p154 = scmp.lt.s32.totalorder %s149, 4
        %s155 = scalar_select %p154, %s149, 4
        %s156 = smul.addr %s155, 8
        %s157 = scalar_lea.vmem %s0, %s156
        %p158 = pneg %p37
        %p159 = pneg %p34
        %s160 = smul.u32 2, %s16
        %s161 = ssub.s32 5, %s160
        %p162 = scmp.lt.s32.totalorder %s161, 2
        %s163 = scalar_select %p162, %s161, 2
        %s164 = smul.u32 8, %s163
        %p165 = scmp.lt.s32.totalorder %s160, 4
        %s166 = scalar_select %p165, %s160, 4
        %s167 = smul.addr %s166, 8
        %s168 = scalar_lea.vmem %s1, %s167
        %p169 = pneg %p63
        %p170 = pneg %p60
        %p171 = pneg %p89
        %p172 = pneg %p86
        %s173 = sand.u32 %s76, 1
        %s174 = scalar_lea.sflag [#allocation3], %s173
        %s175 = sand.u32 %s76, 1
        %s176 = smul.addr %s175, 8
        %s177 = scalar_lea.vmem [#allocation2], %s176
        %s178 = smul.u32 2, %s16
        %s179 = ssub.s32 5, %s178
        %p180 = scmp.lt.s32.totalorder %s179, 2
        %s181 = scalar_select %p180, %s179, 2
        %s182 = smul.u32 8, %s181
        %p183 = scmp.lt.s32.totalorder %s178, 4
        %s184 = scalar_select %p183, %s178, 4
        %s185 = smul.addr %s184, 8
        %s186 = scalar_lea.vmem %s0, %s185
        %s187 = smul.u32 2, %s16
        %s188 = ssub.s32 5, %s187
        %p189 = scmp.lt.s32.totalorder %s188, 2
        %s190 = scalar_select %p189, %s188, 2
        %s191 = smul.u32 8, %s190
        %s192 = smul.u32 2, %s16
        %s193 = ssub.s32 5, %s192
        %p194 = scmp.lt.s32.totalorder %s193, 2
        %s195 = scalar_select %p194, %s193, 2
        %s196 = smul.u32 8, %s195
        %p197 = scmp.lt.s32.totalorder %s192, 4
        %s198 = scalar_select %p197, %s192, 4
        %s199 = smul.addr %s198, 8
        %s200 = scalar_lea.vmem %s1, %s199
        %s201 = smul.u32 2, %s16
        %s202 = ssub.s32 5, %s201
        %p203 = scmp.lt.s32.totalorder %s202, 2
        %s204 = scalar_select %p203, %s202, 2
        %s205 = smul.u32 8, %s204
        %v206 = vld [vmem:[%s186] sm:$0xff]
        %v207 = vld [vmem:[%s186 + $0x8] sm:$0xff]
        %v208 = vld [vmem:[%s200] sm:$0xff]
        %v209 = vld [vmem:[%s200 + $0x8] sm:$0xff]
        %v210 = vlaneseq
        %v211 = vand.u32 %v210, 127
        %212 = vset.pattern.permute.xlu0 0
        %213 = vperm.xlu0 %212, %v208
        %v214 = vpop.permute.xlu0 %213
        %215 = vset.pattern.permute.xlu0 0
        %216 = vperm.xlu0 %215, %v209
        %v217 = vpop.permute.xlu0 %216
        %vm218 = vcmp.eq.s32.totalorder %v211, %v214
        %vm219 = vcmp.eq.s32.totalorder %v211, %v217
        %v220 = vsel %vm218, %v206, 0.0
        %v221 = vsel %vm219, %v207, 0.0
        %vm222 = vcmask 195584
        %v223 = vsel %vm222, %v220, 0.0
        %224 = vadd.xlane.f32.xlu0 %v223
        %v225 = vpop.xlane.xlu0 %224
        %v226 = vsel %vm222, %v221, 0.0
        %227 = vadd.xlane.f32.xlu0 %v226
        %v228 = vpop.xlane.xlu0 %227
        %v229 = vsel %vm218, -1000.0, %v206
        %v230 = vsel %vm219, -1000.0, %v207
        %v231 = vsel %vm222, %v229, -inf
        %232 = vmax.xlane.f32.xlu0 %v231
        %v233 = vpop.xlane.xlu0 %232
        %v234 = vsel %vm222, %v230, -inf
        %235 = vmax.xlane.f32.xlu0 %v234
        %v236 = vpop.xlane.xlu0 %235
        %v237 = vsub.f32 %v225, %v233
        %v238 = vsub.f32 %v228, %v236
        %v239 = vadd.f32 %v237, 50.0
        %v240 = vadd.f32 %v238, 50.0
        %v241 = vmax.f32 %v239, 0.0
        %v242 = vmax.f32 %v240, 0.0
        %s243 = smul.u32 %s16, 16
        %v244 = vlaneseq
        %v245 = vshrl.u32 %v244, 7
        %v246 = vadd.s32 %v245, 8
        %v247 = vstv %s243
        %v248 = vadd.s32 %v247, %v245
        %v249 = vadd.s32 %v247, %v246
        %vm250 = vcmp.lt.s32.totalorder %v248, 40
        %vm251 = vcmp.lt.s32.totalorder %v249, 40
        %v252 = vsel %vm250, %v241, 0.0
        %v253 = vsel %vm251, %v242, 0.0
        %vm254 = vcmask 7168
        %v255 = vsel %vm254, %v252, 0.0
        %v256 = vsel %vm254, %v253, 0.0
        %v257 = vadd.f32 %v255, %v256
        %258 = vadd.xlane.f32.xlu0 %v257
        %v259 = vpop.xlane.xlu0 %258
        %v260 = vrot.slane %v259, 4
        %v261 = vadd.f32 %v259, %v260
        %v262 = vrot.slane %v261, 2
        %v263 = vadd.f32 %v261, %v262
        %v264 = vrot.slane %v263, 1
        %v265 = vadd.f32 %v263, %v264
        %s266 = vtos %v265
        %v267 = vstv %s266
        %v268 = vsub.f32 0.0, %v267
        %269 = vst [vmem:[%s177] sm:$0xff] %v268
        %s270 = sand.u32 %s76, 1
        %s271 = scalar_lea.sflag [#allocation3], %s270
        %s272 = sand.u32 %s76, 1
        %s273 = smul.addr %s272, 8
        %s274 = scalar_lea.vmem [#allocation2], %s273
        // Predicated region
        $region29: #{tpu_custom_call.1} parent=27 // pred_check
          %p275 = pneg %p86
        $region30: #{tpu_custom_call.1} parent=27 // pred_check_branch
          %277 = sbr.rel (%p275) target = $region32
        $region31: #{tpu_custom_call.1} parent=27 // pred_region
          %279 = vsyncadd %s271, 0
          %s280 = smul.addr %s16, 8
          %s281 = scalar_lea.hbm %s2, %s280
          %s283 = sshll.u32 %s274, 4
          %s284 = int_to_ptr.vmem [resolvable:$true] %s283
          %s285 = sshll.u32 %s281, 4
          %s286 = int_to_ptr.hbm [resolvable:$true] %s285
          %288 = dma.vmem_to_hbm [thread:$0]  %s284, 128, %s286, %s271
        $region32: #{tpu_custom_call.1} parent=27 // pred_fallthru
          _
      $region28: #{tpu_custom_call.1} parent=5 // pred_fallthru
        _
      %p289 = scmp.le.s32.totalorder 2, %s11
      // Predicated region
      $region33: #{tpu_custom_call.1} parent=5 // pred_check
        %p290 = pneg %p289
      $region34: #{tpu_custom_call.1} parent=5 // pred_check_branch
        %292 = sbr.rel (%p290) target = $region36
      $region35: #{tpu_custom_call.1} parent=5 // pred_region
        %s293 = ssub.s32 %s11, 2
        // Predicated region
        $region37: #{tpu_custom_call.1} parent=35 // pred_check
          %p294 = pneg %p92
        $region38: #{tpu_custom_call.1} parent=35 // pred_check_branch
          %296 = sbr.rel (%p294) target = $region40
        $region39: #{tpu_custom_call.1} parent=35 // pred_region
          %s297 = sand.u32 %s77, 1
          %s298 = scalar_lea.sflag [#allocation3], %s297
          %s299 = sand.u32 %s77, 1
          %s300 = smul.addr %s299, 8
          %s301 = scalar_lea.vmem [#allocation2], %s300
          %303 = dma.done %s298, 128
        $region40: #{tpu_custom_call.1} parent=35 // pred_fallthru
          _
      $region36: #{tpu_custom_call.1} parent=5 // pred_fallthru
        _
    $region6: #{tpu_custom_call.1} parent=1 // loop_footer
      %s15 = sadd.s32 1, %s11
    $region7: #{tpu_custom_call.1} parent=1 // loop_footer_branch
      %10 = sbr.rel target = $region3
    $region8: #{tpu_custom_call.1} parent=1 // loop_exit
      _
    %304 = vsyncpa [#allocation3], 1
    %s305 = scalar_lea.sflag [#allocation3], 1
    %306 = vsyncpa %s305, 1

</llo_original>
